<compile_context>
chip_gen: v7x
topology: tpu7x:2x2x1
jax: 0.10.0
libtpu: 0.0.40
codegen_flags: <defaults>
</compile_context>

<pallas_src>
import jax
import jax.numpy as jnp
from jax import lax
from jax.experimental import pallas as pl
from jax.experimental.pallas import tpu as pltpu


def _round_up(x, m):
    return ((x + m - 1) // m) * m


def bottleneck_kernel(x_ref, w_ref, wt_ref, b_ref, o_ref):
    # Hot path: two pure MXU matmuls + bias add + relu; weights stay resident.
    x = x_ref[...]                                    # [TB, D_in_p]

    # h = x @ W        (contract x dim 1 with W dim 0)
    h = lax.dot_general(
        x, w_ref[...],
        dimension_numbers=(((1,), (0,)), ((), ())),
        preferred_element_type=jnp.float32,
    )                                                 # [TB, D_h_p]

    # y = h @ W.T      (Wt is pre-transposed -> plain dim-0 contraction, no relayout)
    y = lax.dot_general(
        h, wt_ref[...],
        dimension_numbers=(((1,), (0,)), ((), ())),
        preferred_element_type=jnp.float32,
    )                                                 # [TB, D_in_p]

    y = y + b_ref[...]                                # broadcast [1, D_in_p]
    o_ref[...] = jnp.maximum(y, 0.0).astype(o_ref.dtype)


def bottleneck_forward(x, W, b, *, batch_tile=None):
    B, D_in = x.shape
    D_in_w, D_h = W.shape
    assert D_in == D_in_w

    # ---- Lane-dense padding (exact: zeros contribute nothing, output sliced) ----
    D_in_p = _round_up(D_in, 128)
    D_h_p = _round_up(D_h, 128)

    # Resident weight footprint (f32), conservatively counted double-buffered.
    weight_bytes = (D_in_p * D_h_p + D_h_p * D_in_p + D_in_p) * 4

    # ---- VMEM-budget-driven batch tile (multiple of 8 f32 sublanes) ----
    b_rounded = _round_up(B, 8)
    if batch_tile is None:
        budget = 24 * 1024 * 1024                    # fits v5e/v6e/v7x scoped defaults
        per_row = 2 * 2 * D_in_p * 4                 # x + out, double-buffered, f32
        max_tile = max(8, (budget - 2 * weight_bytes) // per_row)
        batch_tile = min(b_rounded, 512, (max_tile // 8) * 8)
        # v7x dual-TC: make sure the "parallel" batch axis has >=2 steps once
        # there is enough work to split (pure overhead for tiny batches).
        if b_rounded >= 256:
            batch_tile = min(batch_tile, _round_up((b_rounded + 1) // 2, 8))
        batch_tile = max(batch_tile, 8)
    batch_tile = max(8, (batch_tile // 8) * 8)

    B_p = _round_up(B, batch_tile)
    grid = (B_p // batch_tile,)

    # ---- Pad inputs (zero pad is numerically exact for this model) ----
    x_p = jnp.pad(x, ((0, B_p - B), (0, D_in_p - D_in)))
    W_p = jnp.pad(W, ((0, D_in_p - D_in), (0, D_h_p - D_h)))
    Wt_p = jnp.pad(W.T, ((0, D_h_p - D_h), (0, D_in_p - D_in)))
    b_p = jnp.pad(b.reshape(1, D_in), ((0, 0), (0, D_in_p - D_in)))

    # Explicit scoped-VMEM limit derived from the actual footprint (+ headroom),
    # clamped so it is safe on v7x's 64 MiB physical VMEM.
    needed = 2 * weight_bytes + 4 * batch_tile * D_in_p * 4
    vmem_limit = int(min(max(needed + (4 << 20), 16 << 20), 48 << 20))

    out_p = pl.pallas_call(
        bottleneck_kernel,
        out_shape=jax.ShapeDtypeStruct((B_p, D_in_p), x.dtype),
        grid_spec=pl.GridSpec(
            grid=grid,
            in_specs=[
                pl.BlockSpec((batch_tile, D_in_p), lambda i: (i, 0)),  # x: batch-tiled
                pl.BlockSpec((D_in_p, D_h_p), lambda i: (0, 0)),       # W: resident
                pl.BlockSpec((D_h_p, D_in_p), lambda i: (0, 0)),       # W.T: resident
                pl.BlockSpec((1, D_in_p), lambda i: (0, 0)),           # b: resident
            ],
            out_specs=pl.BlockSpec((batch_tile, D_in_p), lambda i: (i, 0)),
        ),
        compiler_params=pltpu.CompilerParams(
            dimension_semantics=("parallel",),
            vmem_limit_bytes=vmem_limit,
        ),
    )(x_p, W_p, Wt_p, b_p)

    return out_p[:B, :D_in]


if __name__ == "__main__":
    # cfg: input_dim=32, hidden_dim=16, batch=8
    input_dim, hidden_dim, batch = 32, 16, 8

    key = jax.random.PRNGKey(0)
    kx, kw = jax.random.split(key)

    # Deterministic parameter init (xavier_normal_ for W, zeros for b)
    xavier_std = (2.0 / (input_dim + hidden_dim)) ** 0.5
    W = jax.random.normal(kw, (input_dim, hidden_dim), jnp.float32) * xavier_std
    b = jnp.zeros((input_dim,), jnp.float32)

    x = jax.random.normal(kx, (batch, input_dim), jnp.float32)

    out = bottleneck_forward(x, W, b)
    out = jax.block_until_ready(out)

    # Reference check in plain JAX (same op ordering as the PyTorch module)
    ref = jnp.maximum((x @ W) @ W.T + b, 0.0)
    assert out.shape == (batch, input_dim)
    assert jnp.allclose(out, ref, atol=1e-5, rtol=1e-5)

    print("KERNEL_OK")
</pallas_src>

<mosaic_0001>
module attributes {stable_mosaic.version = 11 : i64} {
  func.func @bottleneck_kernel(%arg0: i32, %arg1: memref<8x128xf32, #tpu.memory_space<vmem>>, %arg2: memref<128x128xf32, #tpu.memory_space<vmem>>, %arg3: memref<128x128xf32, #tpu.memory_space<vmem>>, %arg4: memref<1x128xf32, #tpu.memory_space<vmem>>, %arg5: memref<8x128xf32, #tpu.memory_space<vmem>>) attributes {dimension_semantics = [#tpu.dimension_semantics<parallel>], iteration_bounds = array<i64: 1>, scalar_prefetch = 0 : i64, scratch_operands = 0 : i64, tpu.core_type = #tpu.core_type<tc>, window_params = [{transform_indices = @transform_0, window_bounds = array<i64: 8, 128>}, {pipeline_mode = #tpu.pipeline_mode<synchronous>, transform_indices = @transform_1, window_bounds = array<i64: 128, 128>}, {pipeline_mode = #tpu.pipeline_mode<synchronous>, transform_indices = @transform_2, window_bounds = array<i64: 128, 128>}, {pipeline_mode = #tpu.pipeline_mode<synchronous>, transform_indices = @transform_3, window_bounds = array<i64: 1, 128>}, {transform_indices = @transform_4, window_bounds = array<i64: 8, 128>}]} {
    %c0 = arith.constant 0 : index
    %c0_0 = arith.constant 0 : index
    %0 = vector.load %arg1[%c0, %c0_0] : memref<8x128xf32, #tpu.memory_space<vmem>>, vector<8x128xf32>
    %c0_1 = arith.constant 0 : index
    %c0_2 = arith.constant 0 : index
    %1 = vector.load %arg2[%c0_1, %c0_2] : memref<128x128xf32, #tpu.memory_space<vmem>>, vector<128x128xf32>
    %cst = arith.constant dense<0.000000e+00> : vector<8x128xf32>
    %2 = tpu.matmul %0, %1, %cst {dimension_numbers = #tpu.dot_dimension_numbers<[1], [0], [0], [1], [0, 0, 1, 1], [], []>} : vector<8x128xf32>, vector<128x128xf32>, vector<8x128xf32> -> vector<8x128xf32>
    %c0_3 = arith.constant 0 : index
    %c0_4 = arith.constant 0 : index
    %3 = vector.load %arg3[%c0_3, %c0_4] : memref<128x128xf32, #tpu.memory_space<vmem>>, vector<128x128xf32>
    %cst_5 = arith.constant dense<0.000000e+00> : vector<8x128xf32>
    %4 = tpu.matmul %2, %3, %cst_5 {dimension_numbers = #tpu.dot_dimension_numbers<[1], [0], [0], [1], [0, 0, 1, 1], [], []>} : vector<8x128xf32>, vector<128x128xf32>, vector<8x128xf32> -> vector<8x128xf32>
    %c0_6 = arith.constant 0 : index
    %c0_7 = arith.constant 0 : index
    %5 = vector.load %arg4[%c0_6, %c0_7] : memref<1x128xf32, #tpu.memory_space<vmem>>, vector<1x128xf32>
    %6 = vector.broadcast %5 : vector<1x128xf32> to vector<8x128xf32>
    %7 = arith.addf %4, %6 : vector<8x128xf32>
    %cst_8 = arith.constant 0.000000e+00 : f32
    %8 = vector.broadcast %cst_8 : f32 to vector<8x128xf32>
    %9 = arith.maximumf %7, %8 : vector<8x128xf32>
    %c0_9 = arith.constant 0 : index
    %c0_10 = arith.constant 0 : index
    %10 = vector.load %arg5[%c0_9, %c0_10] : memref<8x128xf32, #tpu.memory_space<vmem>>, vector<8x128xf32>
    tpu.vector_store %arg5[%c0_9, %c0_10], %9 {strides = array<i32>} : memref<8x128xf32, #tpu.memory_space<vmem>>, vector<8x128xf32>,
    return
  }
  func.func @transform_0(%arg0: i32) -> (i32, i32) {
    %c0_i32 = arith.constant 0 : i32
    %c0_i32_0 = arith.constant 0 : i32
    return %arg0, %c0_i32 : i32, i32
  }
  func.func @transform_1(%arg0: i32) -> (i32, i32) {
    %c0_i32 = arith.constant 0 : i32
    %c0_i32_0 = arith.constant 0 : i32
    %c0_i32_1 = arith.constant 0 : i32
    return %c0_i32, %c0_i32_0 : i32, i32
  }
  func.func @transform_2(%arg0: i32) -> (i32, i32) {
    %c0_i32 = arith.constant 0 : i32
    %c0_i32_0 = arith.constant 0 : i32
    %c0_i32_1 = arith.constant 0 : i32
    return %c0_i32, %c0_i32_0 : i32, i32
  }
  func.func @transform_3(%arg0: i32) -> (i32, i32) {
    %c0_i32 = arith.constant 0 : i32
    %c0_i32_0 = arith.constant 0 : i32
    %c0_i32_1 = arith.constant 0 : i32
    return %c0_i32, %c0_i32_0 : i32, i32
  }
  func.func @transform_4(%arg0: i32) -> (i32, i32) {
    %c0_i32 = arith.constant 0 : i32
    %c0_i32_0 = arith.constant 0 : i32
    return %arg0, %c0_i32 : i32, i32
  }
}

</mosaic_0001>

<llo_original>
// kernel: tpu_custom_call.1
$region0: #{tpu_custom_call.1}
  #allocation0 [shape = 'u32[]', space=smem, size = 0x4, offset = 0x4, fixed_abs, tag = 'smem constant byte address 0x4 - core index']
  #allocation1 [shape = 'u32[144,128]{1,0:T(1,128)}', space=vmem, size = 0x12000, scoped, tag = 'internal scratch']
  %s0 = inlined_call_operand.hbm [shape: f32[8,128], index: 0, kind: input, shape index: {}]
  %s1 = inlined_call_operand.hbm [shape: f32[128,128], index: 1, kind: input, shape index: {}]
  %s2 = inlined_call_operand.hbm [shape: f32[128,128], index: 2, kind: input, shape index: {}]
  %s3 = inlined_call_operand.vmem [shape: f32[1,128], index: 3, kind: input, shape index: {}]
  %s4 = inlined_call_operand.hbm [shape: f32[8,128], index: 4, kind: output, shape index: {}]
  %s5 = sld [smem:[#allocation0]]
  $region38: #{tpu_custom_call.1} parent=0
    _
  %s7 = ssub.s32 1, %s5
  %s8 = scalar_select 0, %s7, %s5
  $region1: #{tpu_custom_call.1} parent=0
    #allocation2 [shape = 'u8[4096]{0}', space=vmem, size = 0x1000, scoped, tag = 'input window, operand 0, single buffered']
    #allocation3 [shape = 's32[1]{0}', space=sflag, size = 0x4, scoped, tag = 'scoped memory for tpu_custom_call.1']
    #allocation4 [shape = 's32[1]{0}', space=sflag, size = 0x4, scoped, tag = 'scoped memory for tpu_custom_call.1']
    #allocation5 [shape = 'u8[65536]{0}', space=vmem, size = 0x10000, scoped, tag = 'input window, operand 1, single buffered']
    #allocation6 [shape = 's32[1]{0}', space=sflag, size = 0x4, scoped, tag = 'scoped memory for tpu_custom_call.1']
    #allocation7 [shape = 'u8[65536]{0}', space=vmem, size = 0x10000, scoped, tag = 'input window, operand 2, single buffered']
    #allocation8 [shape = 'u8[4096]{0}', space=vmem, size = 0x1000, scoped, tag = 'output window, operand 0, single buffered']
    %9 = vsyncpa [#allocation3], 0
    %10 = vsyncpa [#allocation6], 0
    %11 = vsyncpa [#allocation4], 0
    // Predicated region
    $region2: #{tpu_custom_call.1} parent=1 // pred_check
      _
    $region3: #{tpu_custom_call.1} parent=1 // pred_check_branch
      %13 = sbr.rel (0) target = $region5
    $region4: #{tpu_custom_call.1} parent=1 // pred_region
      %s15 = ssub.s32 128, 128
      %16 = vsyncadd [#allocation3], %s15
      %s18 = sshll.u32 [#allocation2], 4
      %s19 = int_to_ptr.vmem [resolvable:$true] %s18
      %21 = dma.hbm_to_vmem [thread:$0]  %s0, 128, %s19, [#allocation3]
    $region5: #{tpu_custom_call.1} parent=1 // pred_fallthru
      _
    // Predicated region
    $region6: #{tpu_custom_call.1} parent=1 // pred_check
      _
    $region7: #{tpu_custom_call.1} parent=1 // pred_check_branch
      %23 = sbr.rel (0) target = $region9
    $region8: #{tpu_custom_call.1} parent=1 // pred_region
      %s25 = ssub.s32 2048, 2048
      %26 = vsyncadd [#allocation6], %s25
      %s27 = sshll.u32 [#allocation5], 4
      %s28 = int_to_ptr.vmem [resolvable:$true] %s27
      %33 = dma.hbm_to_vmem [thread:$0]  %s1, 2048, %s28, [#allocation6], 128, 128, 8
    $region9: #{tpu_custom_call.1} parent=1 // pred_fallthru
      _
    // Predicated region
    $region10: #{tpu_custom_call.1} parent=1 // pred_check
      _
    $region11: #{tpu_custom_call.1} parent=1 // pred_check_branch
      %35 = sbr.rel (0) target = $region13
    $region12: #{tpu_custom_call.1} parent=1 // pred_region
      %s37 = ssub.s32 2048, 2048
      %38 = vsyncadd [#allocation6], %s37
      %s39 = sshll.u32 [#allocation7], 4
      %s40 = int_to_ptr.vmem [resolvable:$true] %s39
      %45 = dma.hbm_to_vmem [thread:$0]  %s2, 2048, %s40, [#allocation6], 128, 128, 8
    $region13: #{tpu_custom_call.1} parent=1 // pred_fallthru
      _
    // Predicated region
    $region14: #{tpu_custom_call.1} parent=1 // pred_check
      _
    $region15: #{tpu_custom_call.1} parent=1 // pred_check_branch
      %47 = sbr.rel (0) target = $region17
    $region16: #{tpu_custom_call.1} parent=1 // pred_region
      _
    $region17: #{tpu_custom_call.1} parent=1 // pred_fallthru
      _
    // Predicated region
    $region18: #{tpu_custom_call.1} parent=1 // pred_check
      _
    $region19: #{tpu_custom_call.1} parent=1 // pred_check_branch
      %49 = sbr.rel (0) target = $region21
    $region20: #{tpu_custom_call.1} parent=1 // pred_region
      %50 = dma.done [#allocation3], 128
    $region21: #{tpu_custom_call.1} parent=1 // pred_fallthru
      _
    // Predicated region
    $region22: #{tpu_custom_call.1} parent=1 // pred_check
      _
    $region23: #{tpu_custom_call.1} parent=1 // pred_check_branch
      %52 = sbr.rel (0) target = $region25
    $region24: #{tpu_custom_call.1} parent=1 // pred_region
      %53 = dma.done [#allocation6], 2048
    $region25: #{tpu_custom_call.1} parent=1 // pred_fallthru
      _
    // Predicated region
    $region26: #{tpu_custom_call.1} parent=1 // pred_check
      _
    $region27: #{tpu_custom_call.1} parent=1 // pred_check_branch
      %55 = sbr.rel (0) target = $region29
    $region28: #{tpu_custom_call.1} parent=1 // pred_region
      %56 = dma.done [#allocation6], 2048
    $region29: #{tpu_custom_call.1} parent=1 // pred_fallthru
      _
    %v57 = vld [vmem:[#allocation2] sm:$0xff]
    %v58 = vld [vmem:[#allocation5] sm:$0xff]
    %v59 = vld [vmem:[#allocation5 + $0x8] sm:$0xff]
    %v60 = vld [vmem:[#allocation5 + $0x10] sm:$0xff]
    %v61 = vld [vmem:[#allocation5 + $0x18] sm:$0xff]
    %v62 = vld [vmem:[#allocation5 + $0x20] sm:$0xff]
    %v63 = vld [vmem:[#allocation5 + $0x28] sm:$0xff]
    %v64 = vld [vmem:[#allocation5 + $0x30] sm:$0xff]
    %v65 = vld [vmem:[#allocation5 + $0x38] sm:$0xff]
    %v66 = vld [vmem:[#allocation5 + $0x40] sm:$0xff]
    %v67 = vld [vmem:[#allocation5 + $0x48] sm:$0xff]
    %v68 = vld [vmem:[#allocation5 + $0x50] sm:$0xff]
    %v69 = vld [vmem:[#allocation5 + $0x58] sm:$0xff]
    %v70 = vld [vmem:[#allocation5 + $0x60] sm:$0xff]
    %v71 = vld [vmem:[#allocation5 + $0x68] sm:$0xff]
    %v72 = vld [vmem:[#allocation5 + $0x70] sm:$0xff]
    %v73 = vld [vmem:[#allocation5 + $0x78] sm:$0xff]
    %74 = vmatprep.subr.mxu0 0.0
    %75 = vmatpush1.msra.mxu0 %v58
    %76 = vmatprep.subr.mxu0 0.0
    %77 = vmatpush1.msra.mxu0 %v59
    %78 = vmatprep.subr.mxu0 0.0
    %79 = vmatpush1.msra.mxu0 %v60
    %80 = vmatprep.subr.mxu0 0.0
    %81 = vmatpush1.msra.mxu0 %v61
    %82 = vmatprep.subr.mxu0 0.0
    %83 = vmatpush1.msra.mxu0 %v62
    %84 = vmatprep.subr.mxu0 0.0
    %85 = vmatpush1.msra.mxu0 %v63
    %86 = vmatprep.subr.mxu0 0.0
    %87 = vmatpush1.msra.mxu0 %v64
    %88 = vmatprep.subr.mxu0 0.0
    %89 = vmatpush1.msra.mxu0 %v65
    %90 = vmatprep.subr.mxu0 0.0
    %91 = vmatpush1.msra.mxu0 %v66
    %92 = vmatprep.subr.mxu0 0.0
    %93 = vmatpush1.msra.mxu0 %v67
    %94 = vmatprep.subr.mxu0 0.0
    %95 = vmatpush1.msra.mxu0 %v68
    %96 = vmatprep.subr.mxu0 0.0
    %97 = vmatpush1.msra.mxu0 %v69
    %98 = vmatprep.subr.mxu0 0.0
    %99 = vmatpush1.msra.mxu0 %v70
    %100 = vmatprep.subr.mxu0 0.0
    %101 = vmatpush1.msra.mxu0 %v71
    %102 = vmatprep.subr.mxu0 0.0
    %103 = vmatpush1.msra.mxu0 %v72
    %104 = vmatprep.subr.mxu0 0.0
    %105 = vmatpush1.msra.mxu0 %v73
    %106 = vmatprep.subr.mxu0 0.0
    %107 = vmatpush1.msra.mxu0 0.0
    %108 = vmatprep.subr.mxu0 0.0
    %109 = vmatpush1.msra.mxu0 0.0
    %110 = vmatprep.subr.mxu0 0.0
    %111 = vmatpush1.msra.mxu0 0.0
    %112 = vmatprep.subr.mxu0 0.0
    %113 = vmatpush1.msra.mxu0 0.0
    %114 = vmatprep.subr.mxu0 0.0
    %115 = vmatpush1.msra.mxu0 0.0
    %116 = vmatprep.subr.mxu0 0.0
    %117 = vmatpush1.msra.mxu0 0.0
    %118 = vmatprep.subr.mxu0 0.0
    %119 = vmatpush1.msra.mxu0 0.0
    %120 = vmatprep.subr.mxu0 0.0
    %121 = vmatpush1.msra.mxu0 0.0
    %122 = vmatprep.subr.mxu0 0.0
    %123 = vmatpush1.msra.mxu0 0.0
    %124 = vmatprep.subr.mxu0 0.0
    %125 = vmatpush1.msra.mxu0 0.0
    %126 = vmatprep.subr.mxu0 0.0
    %127 = vmatpush1.msra.mxu0 0.0
    %128 = vmatprep.subr.mxu0 0.0
    %129 = vmatpush1.msra.mxu0 0.0
    %130 = vmatprep.subr.mxu0 0.0
    %131 = vmatpush1.msra.mxu0 0.0
    %132 = vmatprep.subr.mxu0 0.0
    %133 = vmatpush1.msra.mxu0 0.0
    %134 = vmatprep.subr.mxu0 0.0
    %135 = vmatpush1.msra.mxu0 0.0
    %136 = vmatprep.subr.mxu0 0.0
    %137 = vmatpush1.msra.mxu0 0.0
    %138 = vmatprep.mubr.f32.mxu0 0.0
    %139 = vmatmul.mubr.f32.gmra.mrb[0].mxu0 %v57
    %v140 = vpop.f32.mrb[0].mxu0
    %v141 = vadd.f32 0.0, %v140
    %v142 = vpop.f32.mrb[0].mxu0
    %143 = vdwg.mxu0
    %v144 = vld [vmem:[#allocation7] sm:$0xff]
    %v145 = vld [vmem:[#allocation7 + $0x8] sm:$0xff]
    %v146 = vld [vmem:[#allocation7 + $0x10] sm:$0xff]
    %v147 = vld [vmem:[#allocation7 + $0x18] sm:$0xff]
    %v148 = vld [vmem:[#allocation7 + $0x20] sm:$0xff]
    %v149 = vld [vmem:[#allocation7 + $0x28] sm:$0xff]
    %v150 = vld [vmem:[#allocation7 + $0x30] sm:$0xff]
    %v151 = vld [vmem:[#allocation7 + $0x38] sm:$0xff]
    %v152 = vld [vmem:[#allocation7 + $0x40] sm:$0xff]
    %v153 = vld [vmem:[#allocation7 + $0x48] sm:$0xff]
    %v154 = vld [vmem:[#allocation7 + $0x50] sm:$0xff]
    %v155 = vld [vmem:[#allocation7 + $0x58] sm:$0xff]
    %v156 = vld [vmem:[#allocation7 + $0x60] sm:$0xff]
    %v157 = vld [vmem:[#allocation7 + $0x68] sm:$0xff]
    %v158 = vld [vmem:[#allocation7 + $0x70] sm:$0xff]
    %v159 = vld [vmem:[#allocation7 + $0x78] sm:$0xff]
    %v160 = vld [vmem:[%s3] sm:$0x1]
    %v162 = vlaneseq
    %v163 = vshrl.u32 %v162, 7
    %v164 = vsub.s32 0, %v163
    %v165 = vrot.slane %v160, %v164
    %167 = vmatprep.subr.mxu0 0.0
    %168 = vmatpush1.msra.mxu0 %v144
    %169 = vmatprep.subr.mxu0 0.0
    %170 = vmatpush1.msra.mxu0 %v145
    %171 = vmatprep.subr.mxu0 0.0
    %172 = vmatpush1.msra.mxu0 %v146
    %173 = vmatprep.subr.mxu0 0.0
    %174 = vmatpush1.msra.mxu0 %v147
    %175 = vmatprep.subr.mxu0 0.0
    %176 = vmatpush1.msra.mxu0 %v148
    %177 = vmatprep.subr.mxu0 0.0
    %178 = vmatpush1.msra.mxu0 %v149
    %179 = vmatprep.subr.mxu0 0.0
    %180 = vmatpush1.msra.mxu0 %v150
    %181 = vmatprep.subr.mxu0 0.0
    %182 = vmatpush1.msra.mxu0 %v151
    %183 = vmatprep.subr.mxu0 0.0
    %184 = vmatpush1.msra.mxu0 %v152
    %185 = vmatprep.subr.mxu0 0.0
    %186 = vmatpush1.msra.mxu0 %v153
    %187 = vmatprep.subr.mxu0 0.0
    %188 = vmatpush1.msra.mxu0 %v154
    %189 = vmatprep.subr.mxu0 0.0
    %190 = vmatpush1.msra.mxu0 %v155
    %191 = vmatprep.subr.mxu0 0.0
    %192 = vmatpush1.msra.mxu0 %v156
    %193 = vmatprep.subr.mxu0 0.0
    %194 = vmatpush1.msra.mxu0 %v157
    %195 = vmatprep.subr.mxu0 0.0
    %196 = vmatpush1.msra.mxu0 %v158
    %197 = vmatprep.subr.mxu0 0.0
    %198 = vmatpush1.msra.mxu0 %v159
    %199 = vmatprep.subr.mxu0 0.0
    %200 = vmatpush1.msra.mxu0 0.0
    %201 = vmatprep.subr.mxu0 0.0
    %202 = vmatpush1.msra.mxu0 0.0
    %203 = vmatprep.subr.mxu0 0.0
    %204 = vmatpush1.msra.mxu0 0.0
    %205 = vmatprep.subr.mxu0 0.0
    %206 = vmatpush1.msra.mxu0 0.0
    %207 = vmatprep.subr.mxu0 0.0
    %208 = vmatpush1.msra.mxu0 0.0
    %209 = vmatprep.subr.mxu0 0.0
    %210 = vmatpush1.msra.mxu0 0.0
    %211 = vmatprep.subr.mxu0 0.0
    %212 = vmatpush1.msra.mxu0 0.0
    %213 = vmatprep.subr.mxu0 0.0
    %214 = vmatpush1.msra.mxu0 0.0
    %215 = vmatprep.subr.mxu0 0.0
    %216 = vmatpush1.msra.mxu0 0.0
    %217 = vmatprep.subr.mxu0 0.0
    %218 = vmatpush1.msra.mxu0 0.0
    %219 = vmatprep.subr.mxu0 0.0
    %220 = vmatpush1.msra.mxu0 0.0
    %221 = vmatprep.subr.mxu0 0.0
    %222 = vmatpush1.msra.mxu0 0.0
    %223 = vmatprep.subr.mxu0 0.0
    %224 = vmatpush1.msra.mxu0 0.0
    %225 = vmatprep.subr.mxu0 0.0
    %226 = vmatpush1.msra.mxu0 0.0
    %227 = vmatprep.subr.mxu0 0.0
    %228 = vmatpush1.msra.mxu0 0.0
    %229 = vmatprep.subr.mxu0 0.0
    %230 = vmatpush1.msra.mxu0 0.0
    %231 = vmatprep.mubr.f32.mxu0 0.0
    %232 = vmatmul.mubr.f32.gmra.mrb[0].mxu0 %v141
    %v233 = vpop.f32.mrb[0].mxu0
    %v234 = vadd.f32 %v165, %v233
    %v235 = vpop.f32.mrb[0].mxu0
    %236 = vdwg.mxu0
    %v237 = vmax.f32 %v234, 0.0
    %238 = vst [vmem:[#allocation8] sm:$0xff] %v237
    // Predicated region
    $region30: #{tpu_custom_call.1} parent=1 // pred_check
      _
    $region31: #{tpu_custom_call.1} parent=1 // pred_check_branch
      %240 = sbr.rel (0) target = $region33
    $region32: #{tpu_custom_call.1} parent=1 // pred_region
      %s242 = ssub.s32 128, 128
      %243 = vsyncadd [#allocation4], %s242
      %s245 = sshll.u32 [#allocation8], 4
      %s246 = int_to_ptr.vmem [resolvable:$true] %s245
      %248 = dma.vmem_to_hbm [thread:$0]  %s246, 128, %s4, [#allocation4]
    $region33: #{tpu_custom_call.1} parent=1 // pred_fallthru
      _
    // Predicated region
    $region34: #{tpu_custom_call.1} parent=1 // pred_check
      _
    $region35: #{tpu_custom_call.1} parent=1 // pred_check_branch
      %250 = sbr.rel (0) target = $region37
    $region36: #{tpu_custom_call.1} parent=1 // pred_region
      %251 = dma.done [#allocation4], 128
    $region37: #{tpu_custom_call.1} parent=1 // pred_fallthru
      _
    %252 = vsyncpa [#allocation3], 1
    %253 = vsyncpa [#allocation6], 1
    %254 = vsyncpa [#allocation4], 1

</llo_original>
